<compile_context>
chip_gen: v6e
topology: v6e:2x2x1
jax: 0.10.0
libtpu: 0.0.40
codegen_flags: <defaults>
</compile_context>

<pallas_src>
import functools

import jax
import jax.numpy as jnp
from jax.experimental import pallas as pl
from jax.experimental.pallas import tpu as pltpu


# Contract the last dim of both operands: W (M, K) x X (TB, K) -> (M, TB).
_NT_DIM_NUMBERS = (((1,), (1,)), ((), ()))


def nfm_kernel(x_ref, w1_ref, w2_ref, mlpw_ref, mlpb_ref, hw_ref, fcb_ref, out_ref):
    x = x_ref[...].astype(jnp.float32)            # (TB, dim), batch on sublanes as stored
    xsq = x * x                                   # square in f32 (safe on v5e)

    # Fused x-side matmuls; NT contraction puts the batch on lanes.
    #   r1 rows 0:16 = fm_V @ x^T  (pre-square interactions), row 16 = fc_w @ x^T
    #   r2           = fm_V^2 @ (x^2)^T
    r1 = jax.lax.dot_general(w1_ref[...], x, _NT_DIM_NUMBERS,
                             preferred_element_type=jnp.float32)   # (24, TB)
    r2 = jax.lax.dot_general(w2_ref[...], xsq, _NT_DIM_NUMBERS,
                             preferred_element_type=jnp.float32)   # (16, TB)

    inter = r1[0:16, :]
    t1 = inter * inter                            # (16, TB)
    fm_linear = r1[16:17, :] + fcb_ref[0, 0]      # (1, TB), bias scalar from SMEM
    bilinear = 0.5 * (t1 - r2)                    # f32 difference (cancellation-safe)

    # MLP + ReLU.  PyTorch weight used directly: (a @ W^T)^T == W @ a^T.
    hidden = jnp.dot(mlpw_ref[...], bilinear, preferred_element_type=jnp.float32)
    hidden = jnp.maximum(hidden + mlpb_ref[...], 0.0)              # (16, TB)

    # Final 16 -> 1 projection on VPU (mul) + XLU (sublane reduce); MXU stays free.
    out_row = jnp.sum(hidden * hw_ref[...], axis=0, keepdims=True) + fm_linear
    out_ref[...] = out_row.astype(out_ref.dtype)                   # lane-dense (1, TB)


def _round_up(n, m):
    return ((n + m - 1) // m) * m


@functools.partial(jax.jit, static_argnames=("tb", "x_dtype"))
def nfm_forward(x, fc_w, fc_b, fm_V, mlp_w, mlp_b, h_w, *, tb=2048,
                x_dtype=jnp.float32):
    """x: (B, dim).  Weights in PyTorch layout:
       fc_w (1, dim), fc_b (1,), fm_V (16, dim), mlp_w (16, 16), mlp_b (16,), h_w (1, 16)."""
    B, dim = x.shape

    # Batch tiling: TB rows per grid step; pad B up so the grid tiles evenly.
    if B <= tb:
        TB = max(_round_up(B, 8), 8)
        b_pad = TB
    else:
        assert tb % 128 == 0, "tile size must be a multiple of 128 when tiling"
        TB = tb
        b_pad = _round_up(B, TB)
    num_tiles = b_pad // TB

    xp = x.astype(x_dtype)
    if b_pad != B:
        xp = jnp.pad(xp, ((0, b_pad - B), (0, 0)))

    # Weight prep (tiny, f32, resident in VMEM across all grid steps).
    f32 = jnp.float32
    w1 = jnp.zeros((24, dim), f32)                 # rows 0:16 = fm_V, row 16 = fc_w
    w1 = w1.at[0:16, :].set(fm_V.astype(f32))
    w1 = w1.at[16, :].set(fc_w.astype(f32)[0])
    w2 = jnp.square(fm_V.astype(f32))              # (16, dim)
    mlpw = mlp_w.astype(f32)                       # (16, 16)
    mlpb = mlp_b.astype(f32).reshape(16, 1)
    hw = h_w.astype(f32).reshape(16, 1)            # h_w^T
    fcb = fc_b.astype(f32).reshape(1, 1)           # scalar bias -> SMEM

    const = lambda i: (0, 0)
    out_flat = pl.pallas_call(
        nfm_kernel,
        out_shape=jax.ShapeDtypeStruct((1, b_pad), jnp.float32),
        grid=(num_tiles,),
        in_specs=[
            pl.BlockSpec((TB, dim), lambda i: (i, 0)),           # x tile (pipelined)
            pl.BlockSpec((24, dim), const),                      # [fm_V; fc_w] (resident)
            pl.BlockSpec((16, dim), const),                      # fm_V^2      (resident)
            pl.BlockSpec((16, 16), const),                       # mlp_w
            pl.BlockSpec((16, 1), const),                        # mlp_b (column)
            pl.BlockSpec((16, 1), const),                        # h_w^T (column)
            pl.BlockSpec(memory_space=pltpu.MemorySpace.SMEM),   # fc_b scalar
        ],
        out_specs=pl.BlockSpec((1, TB), lambda i: (0, i)),       # lane-dense output row
        compiler_params=pltpu.CompilerParams(
            dimension_semantics=("parallel",)),
    )(xp, w1, w2, mlpw, mlpb, hw, fcb)

    return out_flat.reshape(b_pad, 1)[:B]


def reference_forward(x, fc_w, fc_b, fm_V, mlp_w, mlp_b, h_w):
    x = x.astype(jnp.float32)
    fm_linear = x @ fc_w.T + fc_b
    t1 = jnp.square(x @ fm_V.T)
    t2 = jnp.square(x) @ jnp.square(fm_V).T
    bilinear = 0.5 * (t1 - t2)
    hidden = jax.nn.relu(bilinear @ mlp_w.T + mlp_b)
    return hidden @ h_w.T + fm_linear


if __name__ == "__main__":
    key = jax.random.PRNGKey(0)
    dim = 32
    k_x, k_fcw, k_fmv, k_mlpw, k_mlpb, k_hw, k_x2 = jax.random.split(key, 7)

    # Deterministic init mirroring NFM.init_weight():
    fc_w = jax.random.uniform(k_fcw, (1, dim), minval=-0.1, maxval=0.1, dtype=jnp.float32)
    fc_b = jnp.full((1,), 0.1, dtype=jnp.float32)
    fm_V = jax.random.uniform(k_fmv, (16, dim), minval=-0.1, maxval=0.1, dtype=jnp.float32)
    bound = 1.0 / (16.0 ** 0.5)
    mlp_w = jax.random.uniform(k_mlpw, (16, 16), minval=-bound, maxval=bound, dtype=jnp.float32)
    mlp_b = jax.random.uniform(k_mlpb, (16,), minval=-bound, maxval=bound, dtype=jnp.float32)
    h_w = jax.random.uniform(k_hw, (1, 16), minval=-0.1, maxval=0.1, dtype=jnp.float32)
    weights = (fc_w, fc_b, fm_V, mlp_w, mlp_b, h_w)

    # 1) Small batch, single tile.
    x_small = jax.random.normal(k_x, (8, dim), dtype=jnp.float32)
    out = jax.block_until_ready(nfm_forward(x_small, *weights))
    ref = reference_forward(x_small, *weights)
    assert out.shape == (8, 1)
    assert jnp.allclose(out, ref, atol=1e-5, rtol=1e-5), float(jnp.max(jnp.abs(out - ref)))

    # 2) Multi-tile grid with tail padding (B=1000 -> 4 tiles of 256 over padded 1024).
    x_big = jax.random.normal(k_x2, (1000, dim), dtype=jnp.float32)
    out2 = jax.block_until_ready(nfm_forward(x_big, *weights, tb=256))
    ref2 = reference_forward(x_big, *weights)
    assert out2.shape == (1000, 1)
    assert jnp.allclose(out2, ref2, atol=1e-4, rtol=1e-4), float(jnp.max(jnp.abs(out2 - ref2)))

    # 3) bf16 storage for x (halves HBM read traffic); accumulation stays f32.
    out3 = jax.block_until_ready(nfm_forward(x_big, *weights, tb=256, x_dtype=jnp.bfloat16))
    assert jnp.allclose(out3, ref2, atol=5e-2, rtol=5e-2), float(jnp.max(jnp.abs(out3 - ref2)))

    print("KERNEL_OK")
</pallas_src>

<mosaic_0001>
module attributes {stable_mosaic.version = 11 : i64} {
  func.func @nfm_kernel(%arg0: i32, %arg1: memref<8x32xf32, #tpu.memory_space<vmem>>, %arg2: memref<24x32xf32, #tpu.memory_space<vmem>>, %arg3: memref<16x32xf32, #tpu.memory_space<vmem>>, %arg4: memref<16x16xf32, #tpu.memory_space<vmem>>, %arg5: memref<16x1xf32, #tpu.memory_space<vmem>>, %arg6: memref<16x1xf32, #tpu.memory_space<vmem>>, %arg7: memref<1x1xf32, #tpu.memory_space<smem>>, %arg8: memref<1x8xf32, #tpu.memory_space<vmem>>) attributes {dimension_semantics = [#tpu.dimension_semantics<parallel>], iteration_bounds = array<i64: 1>, scalar_prefetch = 0 : i64, scratch_operands = 0 : i64, tpu.core_type = #tpu.core_type<tc>, window_params = [{transform_indices = @transform_0, window_bounds = array<i64: 8, 32>}, {pipeline_mode = #tpu.pipeline_mode<synchronous>, transform_indices = @transform_1, window_bounds = array<i64: 24, 32>}, {pipeline_mode = #tpu.pipeline_mode<synchronous>, transform_indices = @transform_2, window_bounds = array<i64: 16, 32>}, {pipeline_mode = #tpu.pipeline_mode<synchronous>, transform_indices = @transform_3, window_bounds = array<i64: 16, 16>}, {pipeline_mode = #tpu.pipeline_mode<synchronous>, transform_indices = @transform_4, window_bounds = array<i64: 16, 1>}, {pipeline_mode = #tpu.pipeline_mode<synchronous>, transform_indices = @transform_5, window_bounds = array<i64: 16, 1>}, {transform_indices = @transform_6, window_bounds = array<i64: 1, 1>}, {transform_indices = @transform_7, window_bounds = array<i64: 1, 8>}]} {
    %c0 = arith.constant 0 : index
    %c0_0 = arith.constant 0 : index
    %0 = vector.load %arg1[%c0, %c0_0] : memref<8x32xf32, #tpu.memory_space<vmem>>, vector<8x32xf32>
    %1 = arith.mulf %0, %0 : vector<8x32xf32>
    %c0_1 = arith.constant 0 : index
    %c0_2 = arith.constant 0 : index
    %2 = vector.load %arg2[%c0_1, %c0_2] : memref<24x32xf32, #tpu.memory_space<vmem>>, vector<24x32xf32>
    %cst = arith.constant dense<0.000000e+00> : vector<24x8xf32>
    %3 = tpu.matmul %2, %0, %cst {dimension_numbers = #tpu.dot_dimension_numbers<[1], [1], [0], [0], [0, 0, 1, 0], [], []>} : vector<24x32xf32>, vector<8x32xf32>, vector<24x8xf32> -> vector<24x8xf32>
    %c0_3 = arith.constant 0 : index
    %c0_4 = arith.constant 0 : index
    %4 = vector.load %arg3[%c0_3, %c0_4] : memref<16x32xf32, #tpu.memory_space<vmem>>, vector<16x32xf32>
    %cst_5 = arith.constant dense<0.000000e+00> : vector<16x8xf32>
    %5 = tpu.matmul %4, %1, %cst_5 {dimension_numbers = #tpu.dot_dimension_numbers<[1], [1], [0], [0], [0, 0, 1, 0], [], []>} : vector<16x32xf32>, vector<8x32xf32>, vector<16x8xf32> -> vector<16x8xf32>
    %6 = vector.extract_strided_slice %3 {offsets = [0, 0], sizes = [16, 8], strides = [1, 1]} : vector<24x8xf32> to vector<16x8xf32>
    %7 = arith.mulf %6, %6 : vector<16x8xf32>
    %8 = vector.extract_strided_slice %3 {offsets = [16, 0], sizes = [1, 8], strides = [1, 1]} : vector<24x8xf32> to vector<1x8xf32>
    %c0_6 = arith.constant 0 : index
    %c0_7 = arith.constant 0 : index
    %9 = memref.load %arg7[%c0_6, %c0_7] : memref<1x1xf32, #tpu.memory_space<smem>>
    %10 = vector.broadcast %9 : f32 to vector<1x8xf32>
    %11 = arith.addf %8, %10 : vector<1x8xf32>
    %12 = arith.subf %7, %5 : vector<16x8xf32>
    %cst_8 = arith.constant 5.000000e-01 : f32
    %13 = vector.broadcast %cst_8 : f32 to vector<16x8xf32>
    %14 = arith.mulf %13, %12 : vector<16x8xf32>
    %c0_9 = arith.constant 0 : index
    %c0_10 = arith.constant 0 : index
    %15 = vector.load %arg4[%c0_9, %c0_10] : memref<16x16xf32, #tpu.memory_space<vmem>>, vector<16x16xf32>
    %cst_11 = arith.constant dense<0.000000e+00> : vector<16x8xf32>
    %16 = tpu.matmul %15, %14, %cst_11 {dimension_numbers = #tpu.dot_dimension_numbers<[1], [0], [0], [1], [0, 0, 1, 1], [], []>} : vector<16x16xf32>, vector<16x8xf32>, vector<16x8xf32> -> vector<16x8xf32>
    %c0_12 = arith.constant 0 : index
    %c0_13 = arith.constant 0 : index
    %17 = vector.load %arg5[%c0_12, %c0_13] : memref<16x1xf32, #tpu.memory_space<vmem>>, vector<16x1xf32>
    %18 = vector.broadcast %17 : vector<16x1xf32> to vector<16x8xf32>
    %19 = arith.addf %16, %18 : vector<16x8xf32>
    %cst_14 = arith.constant 0.000000e+00 : f32
    %20 = vector.broadcast %cst_14 : f32 to vector<16x8xf32>
    %21 = arith.maximumf %19, %20 : vector<16x8xf32>
    %c0_15 = arith.constant 0 : index
    %c0_16 = arith.constant 0 : index
    %22 = vector.load %arg6[%c0_15, %c0_16] : memref<16x1xf32, #tpu.memory_space<vmem>>, vector<16x1xf32>
    %23 = vector.broadcast %22 : vector<16x1xf32> to vector<16x8xf32>
    %24 = arith.mulf %21, %23 : vector<16x8xf32>
    %cst_17 = arith.constant dense<0.000000e+00> : vector<8xf32>
    %25 = vector.multi_reduction <add>, %24, %cst_17 [0] : vector<16x8xf32> to vector<8xf32>
    %26 = vector.shape_cast %25 : vector<8xf32> to vector<1x8xf32>
    %27 = arith.addf %26, %11 : vector<1x8xf32>
    %c0_18 = arith.constant 0 : index
    %c0_19 = arith.constant 0 : index
    %28 = vector.load %arg8[%c0_18, %c0_19] : memref<1x8xf32, #tpu.memory_space<vmem>>, vector<1x8xf32>
    tpu.vector_store %arg8[%c0_18, %c0_19], %27 {strides = array<i32>} : memref<1x8xf32, #tpu.memory_space<vmem>>, vector<1x8xf32>,
    return
  }
  func.func @transform_0(%arg0: i32) -> (i32, i32) {
    %c0_i32 = arith.constant 0 : i32
    %c0_i32_0 = arith.constant 0 : i32
    return %arg0, %c0_i32 : i32, i32
  }
  func.func @transform_1(%arg0: i32) -> (i32, i32) {
    %c0_i32 = arith.constant 0 : i32
    %c0_i32_0 = arith.constant 0 : i32
    %c0_i32_1 = arith.constant 0 : i32
    return %c0_i32, %c0_i32_0 : i32, i32
  }
  func.func @transform_2(%arg0: i32) -> (i32, i32) {
    %c0_i32 = arith.constant 0 : i32
    %c0_i32_0 = arith.constant 0 : i32
    %c0_i32_1 = arith.constant 0 : i32
    return %c0_i32, %c0_i32_0 : i32, i32
  }
  func.func @transform_3(%arg0: i32) -> (i32, i32) {
    %c0_i32 = arith.constant 0 : i32
    %c0_i32_0 = arith.constant 0 : i32
    %c0_i32_1 = arith.constant 0 : i32
    return %c0_i32, %c0_i32_0 : i32, i32
  }
  func.func @transform_4(%arg0: i32) -> (i32, i32) {
    %c0_i32 = arith.constant 0 : i32
    %c0_i32_0 = arith.constant 0 : i32
    %c0_i32_1 = arith.constant 0 : i32
    return %c0_i32, %c0_i32_0 : i32, i32
  }
  func.func @transform_5(%arg0: i32) -> (i32, i32) {
    %c0_i32 = arith.constant 0 : i32
    %c0_i32_0 = arith.constant 0 : i32
    %c0_i32_1 = arith.constant 0 : i32
    return %c0_i32, %c0_i32_0 : i32, i32
  }
  func.func @transform_6(%arg0: i32) -> (i32, i32) {
    %c0_i32 = arith.constant 0 : i32
    %c0_i32_0 = arith.constant 0 : i32
    %c0_i32_1 = arith.constant 0 : i32
    return %c0_i32, %c0_i32_0 : i32, i32
  }
  func.func @transform_7(%arg0: i32) -> (i32, i32) {
    %c0_i32 = arith.constant 0 : i32
    %c0_i32_0 = arith.constant 0 : i32
    return %c0_i32, %arg0 : i32, i32
  }
}

</mosaic_0001>

<llo_original>
// kernel: square.1
$region0: #{square.1}
  #allocation0 [shape = 's32[1]{0}', space=sflag, size = 0x4, scoped, tag = 'scoped memory for square.1']
  %s0 = inlined_call_operand.vmem [shape: f32[16,32], index: 0, kind: input, shape index: {}, may-alias: {0,1}]
  %s1 = inlined_call_operand.vmem [shape: f32[16,32], index: 1, kind: input, shape index: {}, may-alias: {0,1}]
  %s2 = inlined_call_operand.vmem [shape: f32[16,32], index: 2, kind: output, shape index: {}]
  %v3 = vld [vmem:[%s0] sm:$0xff]
  %v4 = vld [vmem:[%s1] sm:$0xff]
  %5 = xla_tuple %v3, %v4
  %6 = xla_tuple %5
  %v7 = vmul.f32 %v3, %v4
  %8 = xla_tuple %v7
  %9 = vst [vmem:[%s2] sm:$0xff] %v7
  %s10 = scalar_lea.vmem %s0, 8
  %v11 = vld [vmem:[%s10] sm:$0xff]
  %s12 = scalar_lea.vmem %s1, 8
  %v13 = vld [vmem:[%s12] sm:$0xff]
  %14 = xla_tuple %v11, %v13
  %15 = xla_tuple %14
  %v16 = vmul.f32 %v11, %v13
  %17 = xla_tuple %v16
  %s18 = scalar_lea.vmem %s2, 8
  %19 = vst [vmem:[%s18] sm:$0xff] %v16

// kernel: nfm_forward.1
$region0: #{nfm_forward.1}
  #allocation0 [shape = 'u32[]', space=smem, size = 0x4, offset = 0x4, fixed_abs, tag = 'smem constant byte address 0x4 - core index']
  #allocation1 [shape = 'u32[144,128]{1,0:T(1,128)}', space=vmem, size = 0x12000, scoped, tag = 'internal scratch']
  #allocation2 [shape = 'f32[1,1]{1,0:T(1,128)S(6)}', space=smem, size = 0x200, scoped, tag = 'scoped memory for nfm_forward.1']
  %s0 = inlined_call_operand.vmem [shape: f32[8,32], index: 0, kind: input, shape index: {}]
  %s1 = inlined_call_operand.vmem [shape: f32[24,32], index: 1, kind: input, shape index: {}]
  %s2 = inlined_call_operand.vmem [shape: f32[16,32], index: 2, kind: input, shape index: {}]
  %s3 = inlined_call_operand.vmem [shape: f32[16,16], index: 3, kind: input, shape index: {}]
  %s4 = inlined_call_operand.vmem [shape: f32[16,1], index: 4, kind: input, shape index: {}]
  %s5 = inlined_call_operand.vmem [shape: f32[16,1], index: 5, kind: input, shape index: {}]
  %s6 = inlined_call_operand.<no memory space> [shape: f32[1,1], index: 6, kind: input, shape index: {}]
  %s7 = inlined_call_operand.hbm [shape: f32[1,8], index: 7, kind: output, shape index: {}]
  %s8 = sld [smem:[#allocation0]]
  $region38: #{nfm_forward.1} parent=0
    _
  %s10 = ssub.s32 1, %s8
  %s11 = scalar_select 0, %s10, %s8
  %12 = sst [smem:[#allocation2]] %s6
  $region1: #{nfm_forward.1} parent=0
    #allocation3 [shape = 'u8[512]{0}', space=vmem, size = 0x400, scoped, tag = 'output window, operand 0, single buffered']
    #allocation4 [shape = 's32[1]{0}', space=sflag, size = 0x4, scoped, tag = 'scoped memory for nfm_forward.1']
    %13 = vsyncpa [#allocation4], 0
    // Predicated region
    $region2: #{nfm_forward.1} parent=1 // pred_check
      _
    $region3: #{nfm_forward.1} parent=1 // pred_check_branch
      %15 = sbr.rel (0) target = $region5
    $region4: #{nfm_forward.1} parent=1 // pred_region
      _
    $region5: #{nfm_forward.1} parent=1 // pred_fallthru
      _
    // Predicated region
    $region6: #{nfm_forward.1} parent=1 // pred_check
      _
    $region7: #{nfm_forward.1} parent=1 // pred_check_branch
      %17 = sbr.rel (0) target = $region9
    $region8: #{nfm_forward.1} parent=1 // pred_region
      _
    $region9: #{nfm_forward.1} parent=1 // pred_fallthru
      _
    // Predicated region
    $region10: #{nfm_forward.1} parent=1 // pred_check
      _
    $region11: #{nfm_forward.1} parent=1 // pred_check_branch
      %19 = sbr.rel (0) target = $region13
    $region12: #{nfm_forward.1} parent=1 // pred_region
      _
    $region13: #{nfm_forward.1} parent=1 // pred_fallthru
      _
    // Predicated region
    $region14: #{nfm_forward.1} parent=1 // pred_check
      _
    $region15: #{nfm_forward.1} parent=1 // pred_check_branch
      %21 = sbr.rel (0) target = $region17
    $region16: #{nfm_forward.1} parent=1 // pred_region
      _
    $region17: #{nfm_forward.1} parent=1 // pred_fallthru
      _
    // Predicated region
    $region18: #{nfm_forward.1} parent=1 // pred_check
      _
    $region19: #{nfm_forward.1} parent=1 // pred_check_branch
      %23 = sbr.rel (0) target = $region21
    $region20: #{nfm_forward.1} parent=1 // pred_region
      _
    $region21: #{nfm_forward.1} parent=1 // pred_fallthru
      _
    // Predicated region
    $region22: #{nfm_forward.1} parent=1 // pred_check
      _
    $region23: #{nfm_forward.1} parent=1 // pred_check_branch
      %25 = sbr.rel (0) target = $region25
    $region24: #{nfm_forward.1} parent=1 // pred_region
      _
    $region25: #{nfm_forward.1} parent=1 // pred_fallthru
      _
    // Predicated region
    $region26: #{nfm_forward.1} parent=1 // pred_check
      _
    $region27: #{nfm_forward.1} parent=1 // pred_check_branch
      %27 = sbr.rel (0) target = $region29
    $region28: #{nfm_forward.1} parent=1 // pred_region
      _
    $region29: #{nfm_forward.1} parent=1 // pred_fallthru
      _
    %v28 = vld [vmem:[%s0] sm:$0xff]
    %v29 = vmul.f32 %v28, %v28
    %v30 = vld [vmem:[%s1] sm:$0xff]
    %v31 = vld [vmem:[%s1 + $0x8] sm:$0xff]
    %v32 = vld [vmem:[%s1 + $0x10] sm:$0xff]
    %vm33 = vcmask 261120
    %v35 = vsel %vm33, %v30, 0
    %v38 = vsel %vm33, %v31, 0
    %v41 = vsel %vm33, %v32, 0
    %v44 = vsel %vm33, %v28, 0
    %46 = vmatprep.subr.mxu0 0.0
    %47 = vmatpush1.xpose.msra.mxu0 0.0
    %48 = vmatprep.subr.mxu0 0.0
    %49 = vmatpush1.xpose.msra.mxu0 0.0
    %50 = vmatprep.subr.mxu0 0.0
    %51 = vmatpush1.xpose.msra.mxu0 0.0
    %52 = vmatprep.subr.mxu0 0.0
    %53 = vmatpush1.xpose.msra.mxu0 0.0
    %54 = vmatprep.subr.mxu0 0.0
    %55 = vmatpush1.xpose.msra.mxu0 0.0
    %56 = vmatprep.subr.mxu0 0.0
    %57 = vmatpush1.xpose.msra.mxu0 0.0
    %58 = vmatprep.subr.mxu0 0.0
    %59 = vmatpush1.xpose.msra.mxu0 0.0
    %60 = vmatprep.subr.mxu0 0.0
    %61 = vmatpush1.xpose.msra.mxu0 0.0
    %62 = vmatprep.subr.mxu0 0.0
    %63 = vmatpush1.xpose.msra.mxu0 0.0
    %64 = vmatprep.subr.mxu0 0.0
    %65 = vmatpush1.xpose.msra.mxu0 0.0
    %66 = vmatprep.subr.mxu0 0.0
    %67 = vmatpush1.xpose.msra.mxu0 0.0
    %68 = vmatprep.subr.mxu0 0.0
    %69 = vmatpush1.xpose.msra.mxu0 0.0
    %70 = vmatprep.subr.mxu0 0.0
    %71 = vmatpush1.xpose.msra.mxu0 0.0
    %72 = vmatprep.subr.mxu0 0.0
    %73 = vmatpush1.xpose.msra.mxu0 0.0
    %74 = vmatprep.subr.mxu0 0.0
    %75 = vmatpush1.xpose.msra.mxu0 0.0
    %76 = vmatprep.subr.mxu0 0.0
    %77 = vmatpush1.xpose.msra.mxu0 %v44
    %78 = vmatprep.subr.mxu0 0.0
    %79 = vmatpush2.xpose.msra.mxu0 0.0
    %80 = vmatprep.subr.mxu0 0.0
    %81 = vmatpush2.xpose.msra.mxu0 0.0
    %82 = vmatprep.subr.mxu0 0.0
    %83 = vmatpush2.xpose.msra.mxu0 0.0
    %84 = vmatprep.subr.mxu0 0.0
    %85 = vmatpush2.xpose.msra.mxu0 0.0
    %86 = vmatprep.subr.mxu0 0.0
    %87 = vmatpush2.xpose.msra.mxu0 0.0
    %88 = vmatprep.subr.mxu0 0.0
    %89 = vmatpush2.xpose.msra.mxu0 0.0
    %90 = vmatprep.subr.mxu0 0.0
    %91 = vmatpush2.xpose.msra.mxu0 0.0
    %92 = vmatprep.subr.mxu0 0.0
    %93 = vmatpush2.xpose.msra.mxu0 0.0
    %94 = vmatprep.subr.mxu0 0.0
    %95 = vmatpush2.xpose.msra.mxu0 0.0
    %96 = vmatprep.subr.mxu0 0.0
    %97 = vmatpush2.xpose.msra.mxu0 0.0
    %98 = vmatprep.subr.mxu0 0.0
    %99 = vmatpush2.xpose.msra.mxu0 0.0
    %100 = vmatprep.subr.mxu0 0.0
    %101 = vmatpush2.xpose.msra.mxu0 0.0
    %102 = vmatprep.subr.mxu0 0.0
    %103 = vmatpush2.xpose.msra.mxu0 0.0
    %104 = vmatprep.subr.mxu0 0.0
    %105 = vmatpush2.xpose.msra.mxu0 0.0
    %106 = vmatprep.subr.mxu0 0.0
    %107 = vmatpush2.xpose.msra.mxu0 0.0
    %108 = vmatprep.subr.mxu0 0.0
    %109 = vmatpush2.xpose.msra.mxu0 0.0
    %110 = vmatprep.mubr.f32.mxu0 0.0
    %111 = vmatmul.mubr.f32.gmra.mxu0 %v35
    %v112 = vpop.f32.mrf.mxu0
    %v113 = vadd.f32 0.0, %v112
    %v114 = vpop.f32.mrf.mxu0
    %115 = vmatprep.mubr.f32.mxu0 0.0
    %116 = vmatmul.mubr.f32.gmra.mxu0 %v38
    %v117 = vpop.f32.mrf.mxu0
    %v118 = vadd.f32 0.0, %v117
    %v119 = vpop.f32.mrf.mxu0
    %120 = vmatprep.mubr.f32.mxu0 0.0
    %121 = vmatmul.mubr.f32.gmra.mxu0 %v41
    %v122 = vpop.f32.mrf.mxu0
    %v123 = vadd.f32 0.0, %v122
    %v124 = vpop.f32.mrf.mxu0
    %125 = vdwg.mxu0
    %v126 = vld [vmem:[%s2] sm:$0xff]
    %v127 = vld [vmem:[%s2 + $0x8] sm:$0xff]
    %v129 = vsel %vm33, %v126, 0
    %v132 = vsel %vm33, %v127, 0
    %v135 = vsel %vm33, %v29, 0
    %137 = vmatprep.subr.mxu0 0.0
    %138 = vmatpush1.xpose.msra.mxu0 0.0
    %139 = vmatprep.subr.mxu0 0.0
    %140 = vmatpush1.xpose.msra.mxu0 0.0
    %141 = vmatprep.subr.mxu0 0.0
    %142 = vmatpush1.xpose.msra.mxu0 0.0
    %143 = vmatprep.subr.mxu0 0.0
    %144 = vmatpush1.xpose.msra.mxu0 0.0
    %145 = vmatprep.subr.mxu0 0.0
    %146 = vmatpush1.xpose.msra.mxu0 0.0
    %147 = vmatprep.subr.mxu0 0.0
    %148 = vmatpush1.xpose.msra.mxu0 0.0
    %149 = vmatprep.subr.mxu0 0.0
    %150 = vmatpush1.xpose.msra.mxu0 0.0
    %151 = vmatprep.subr.mxu0 0.0
    %152 = vmatpush1.xpose.msra.mxu0 0.0
    %153 = vmatprep.subr.mxu0 0.0
    %154 = vmatpush1.xpose.msra.mxu0 0.0
    %155 = vmatprep.subr.mxu0 0.0
    %156 = vmatpush1.xpose.msra.mxu0 0.0
    %157 = vmatprep.subr.mxu0 0.0
    %158 = vmatpush1.xpose.msra.mxu0 0.0
    %159 = vmatprep.subr.mxu0 0.0
    %160 = vmatpush1.xpose.msra.mxu0 0.0
    %161 = vmatprep.subr.mxu0 0.0
    %162 = vmatpush1.xpose.msra.mxu0 0.0
    %163 = vmatprep.subr.mxu0 0.0
    %164 = vmatpush1.xpose.msra.mxu0 0.0
    %165 = vmatprep.subr.mxu0 0.0
    %166 = vmatpush1.xpose.msra.mxu0 0.0
    %167 = vmatprep.subr.mxu0 0.0
    %168 = vmatpush1.xpose.msra.mxu0 %v135
    %169 = vmatprep.subr.mxu0 0.0
    %170 = vmatpush2.xpose.msra.mxu0 0.0
    %171 = vmatprep.subr.mxu0 0.0
    %172 = vmatpush2.xpose.msra.mxu0 0.0
    %173 = vmatprep.subr.mxu0 0.0
    %174 = vmatpush2.xpose.msra.mxu0 0.0
    %175 = vmatprep.subr.mxu0 0.0
    %176 = vmatpush2.xpose.msra.mxu0 0.0
    %177 = vmatprep.subr.mxu0 0.0
    %178 = vmatpush2.xpose.msra.mxu0 0.0
    %179 = vmatprep.subr.mxu0 0.0
    %180 = vmatpush2.xpose.msra.mxu0 0.0
    %181 = vmatprep.subr.mxu0 0.0
    %182 = vmatpush2.xpose.msra.mxu0 0.0
    %183 = vmatprep.subr.mxu0 0.0
    %184 = vmatpush2.xpose.msra.mxu0 0.0
    %185 = vmatprep.subr.mxu0 0.0
    %186 = vmatpush2.xpose.msra.mxu0 0.0
    %187 = vmatprep.subr.mxu0 0.0
    %188 = vmatpush2.xpose.msra.mxu0 0.0
    %189 = vmatprep.subr.mxu0 0.0
    %190 = vmatpush2.xpose.msra.mxu0 0.0
    %191 = vmatprep.subr.mxu0 0.0
    %192 = vmatpush2.xpose.msra.mxu0 0.0
    %193 = vmatprep.subr.mxu0 0.0
    %194 = vmatpush2.xpose.msra.mxu0 0.0
    %195 = vmatprep.subr.mxu0 0.0
    %196 = vmatpush2.xpose.msra.mxu0 0.0
    %197 = vmatprep.subr.mxu0 0.0
    %198 = vmatpush2.xpose.msra.mxu0 0.0
    %199 = vmatprep.subr.mxu0 0.0
    %200 = vmatpush2.xpose.msra.mxu0 0.0
    %201 = vmatprep.mubr.f32.mxu0 0.0
    %202 = vmatmul.mubr.f32.gmra.mxu0 %v129
    %v203 = vpop.f32.mrf.mxu0
    %v204 = vadd.f32 0.0, %v203
    %v205 = vpop.f32.mrf.mxu0
    %206 = vmatprep.mubr.f32.mxu0 0.0
    %207 = vmatmul.mubr.f32.gmra.mxu0 %v132
    %v208 = vpop.f32.mrf.mxu0
    %v209 = vadd.f32 0.0, %v208
    %v210 = vpop.f32.mrf.mxu0
    %211 = vdwg.mxu0
    %v212 = vmul.f32 %v113, %v113
    %v213 = vmul.f32 %v118, %v118
    %s214 = sld [smem:[#allocation2]]
    %v215 = vstv %s214
    %v216 = vadd.f32 %v123, %v215
    %v217 = vsub.f32 %v212, %v204
    %v218 = vsub.f32 %v213, %v209
    %v219 = vmul.f32 %v217, 0.5
    %v220 = vmul.f32 %v218, 0.5
    %v221 = vld [vmem:[%s3] sm:$0xff]
    %v222 = vld [vmem:[%s3 + $0x8] sm:$0xff]
    %v223 = vld [vmem:[%s4] sm:$0xff]
    %v224 = vld [vmem:[%s4 + $0x8] sm:$0xff]
    %226 = vset.pattern.permute.xlu0 0
    %227 = vperm.xlu0 %226, %v223
    %v228 = vpop.permute.xlu0 %227
    %231 = vset.pattern.permute.xlu0 0
    %232 = vperm.xlu0 %231, %v224
    %v233 = vpop.permute.xlu0 %232
    %vm235 = vcmask 130048
    %v237 = vsel %vm235, %v221, 0
    %v240 = vsel %vm235, %v222, 0
    %242 = vmatprep.subr.mxu0 0.0
    %243 = vmatpush1.msra.mxu0 0.0
    %244 = vmatprep.subr.mxu0 0.0
    %245 = vmatpush1.msra.mxu0 0.0
    %246 = vmatprep.subr.mxu0 0.0
    %247 = vmatpush1.msra.mxu0 0.0
    %248 = vmatprep.subr.mxu0 0.0
    %249 = vmatpush1.msra.mxu0 0.0
    %250 = vmatprep.subr.mxu0 0.0
    %251 = vmatpush1.msra.mxu0 0.0
    %252 = vmatprep.subr.mxu0 0.0
    %253 = vmatpush1.msra.mxu0 0.0
    %254 = vmatprep.subr.mxu0 0.0
    %255 = vmatpush1.msra.mxu0 0.0
    %256 = vmatprep.subr.mxu0 0.0
    %257 = vmatpush1.msra.mxu0 0.0
    %258 = vmatprep.subr.mxu0 0.0
    %259 = vmatpush1.msra.mxu0 0.0
    %260 = vmatprep.subr.mxu0 0.0
    %261 = vmatpush1.msra.mxu0 0.0
    %262 = vmatprep.subr.mxu0 0.0
    %263 = vmatpush1.msra.mxu0 0.0
    %264 = vmatprep.subr.mxu0 0.0
    %265 = vmatpush1.msra.mxu0 0.0
    %266 = vmatprep.subr.mxu0 0.0
    %267 = vmatpush1.msra.mxu0 0.0
    %268 = vmatprep.subr.mxu0 0.0
    %269 = vmatpush1.msra.mxu0 0.0
    %270 = vmatprep.subr.mxu0 0.0
    %271 = vmatpush1.msra.mxu0 %v220
    %272 = vmatprep.subr.mxu0 0.0
    %273 = vmatpush1.msra.mxu0 %v219
    %274 = vmatprep.subr.mxu0 0.0
    %275 = vmatpush2.msra.mxu0 0.0
    %276 = vmatprep.subr.mxu0 0.0
    %277 = vmatpush2.msra.mxu0 0.0
    %278 = vmatprep.subr.mxu0 0.0
    %279 = vmatpush2.msra.mxu0 0.0
    %280 = vmatprep.subr.mxu0 0.0
    %281 = vmatpush2.msra.mxu0 0.0
    %282 = vmatprep.subr.mxu0 0.0
    %283 = vmatpush2.msra.mxu0 0.0
    %284 = vmatprep.subr.mxu0 0.0
    %285 = vmatpush2.msra.mxu0 0.0
    %286 = vmatprep.subr.mxu0 0.0
    %287 = vmatpush2.msra.mxu0 0.0
    %288 = vmatprep.subr.mxu0 0.0
    %289 = vmatpush2.msra.mxu0 0.0
    %290 = vmatprep.subr.mxu0 0.0
    %291 = vmatpush2.msra.mxu0 0.0
    %292 = vmatprep.subr.mxu0 0.0
    %293 = vmatpush2.msra.mxu0 0.0
    %294 = vmatprep.subr.mxu0 0.0
    %295 = vmatpush2.msra.mxu0 0.0
    %296 = vmatprep.subr.mxu0 0.0
    %297 = vmatpush2.msra.mxu0 0.0
    %298 = vmatprep.subr.mxu0 0.0
    %299 = vmatpush2.msra.mxu0 0.0
    %300 = vmatprep.subr.mxu0 0.0
    %301 = vmatpush2.msra.mxu0 0.0
    %302 = vmatprep.subr.mxu0 0.0
    %303 = vmatpush2.msra.mxu0 0.0
    %304 = vmatprep.subr.mxu0 0.0
    %305 = vmatpush2.msra.mxu0 0.0
    %306 = vmatprep.mubr.f32.mxu0 0.0
    %307 = vmatmul.mubr.f32.gmra.mxu0 %v237
    %v308 = vpop.f32.mrf.mxu0
    %v309 = vadd.f32 %v228, %v308
    %v310 = vpop.f32.mrf.mxu0
    %311 = vmatprep.mubr.f32.mxu0 0.0
    %312 = vmatmul.mubr.f32.gmra.mxu0 %v240
    %v313 = vpop.f32.mrf.mxu0
    %v314 = vadd.f32 %v233, %v313
    %v315 = vpop.f32.mrf.mxu0
    %316 = vdwg.mxu0
    %v317 = vmax.f32 %v309, 0.0
    %v318 = vmax.f32 %v314, 0.0
    %v319 = vld [vmem:[%s5] sm:$0xff]
    %v320 = vld [vmem:[%s5 + $0x8] sm:$0xff]
    %322 = vset.pattern.permute.xlu0 0
    %323 = vperm.xlu0 %322, %v319
    %v324 = vpop.permute.xlu0 %323
    %327 = vset.pattern.permute.xlu0 0
    %328 = vperm.xlu0 %327, %v320
    %v329 = vpop.permute.xlu0 %328
    %v331 = vmul.f32 %v317, %v324
    %v332 = vmul.f32 %v318, %v329
    %vm333 = vcmask 64512
    %v334 = vsel %vm333, %v331, 0.0
    %v335 = vsel %vm333, %v332, 0.0
    %v336 = vadd.f32 %v334, %v335
    %v337 = vrot.slane %v336, 4
    %v338 = vadd.f32 %v336, %v337
    %v339 = vrot.slane %v338, 2
    %v340 = vadd.f32 %v338, %v339
    %v341 = vrot.slane %v340, 1
    %v342 = vadd.f32 %v340, %v341
    %v343 = vadd.f32 %v342, %v216
    %vm344 = vcmask 57344
    %345 = vst.msk [vmem:[#allocation3] sm:$0x1] %vm344, %v343
    // Predicated region
    $region30: #{nfm_forward.1} parent=1 // pred_check
      _
    $region31: #{nfm_forward.1} parent=1 // pred_check_branch
      %347 = sbr.rel (0) target = $region33
    $region32: #{nfm_forward.1} parent=1 // pred_region
      %s349 = ssub.s32 16, 16
      %350 = vsyncadd [#allocation4], %s349
      %s352 = sshll.u32 [#allocation3], 4
      %s353 = int_to_ptr.vmem [resolvable:$true] %s352
      %355 = dma.vmem_to_hbm [thread:$0]  %s353, 16, %s7, [#allocation4]
    $region33: #{nfm_forward.1} parent=1 // pred_fallthru
      _
    // Predicated region
    $region34: #{nfm_forward.1} parent=1 // pred_check
      _
    $region35: #{nfm_forward.1} parent=1 // pred_check_branch
      %357 = sbr.rel (0) target = $region37
    $region36: #{nfm_forward.1} parent=1 // pred_region
      %358 = dma.done [#allocation4], 16
    $region37: #{nfm_forward.1} parent=1 // pred_fallthru
      _
    %359 = vsyncpa [#allocation4], 1

</llo_original>
